<compile_context>
chip_gen: v6e
topology: v6e:2x2x1
jax: 0.10.0
libtpu: 0.0.40
codegen_flags: <defaults>
</compile_context>

<pallas_src>
import jax
import jax.numpy as jnp
from jax.experimental import pallas as pl
from jax.experimental.pallas import tpu as pltpu


def _gru_last_step_kernel(x_ref, w_ref, b_ref, out_ref):
    """GRUCell(x[:, -1, :], h=0) with all dead work removed.

    x_ref  : (B, S, 2)  full input sequence (only the last step is used)
    w_ref  : (2, 3H)    weight_ih.T, gate order [r | z | n] along lanes
    b_ref  : (2, 3H)    row 0 = [bih_r+bhh_r, bih_z+bhh_z, bih_n]
                        row 1 = [0,           0,           bhh_n ]
    out_ref: (B, H)
    """
    seq = x_ref.shape[1]
    hidden = out_ref.shape[1]

    xt = x_ref[:, seq - 1, :]            # (B, 2)  last timestep
    x0 = xt[:, 0:1]                      # (B, 1)
    x1 = xt[:, 1:2]                      # (B, 1)

    # Joint input projection for all 3 gates: two broadcast-FMAs + one add on
    # the VPU (K=2 is far too small for the MXU), 96/128 lanes of one vreg row.
    gi = x0 * w_ref[0:1, :] + x1 * w_ref[1:2, :] + b_ref[0:1, :]   # (B, 3H)

    r = jax.nn.sigmoid(gi[:, 0:hidden])
    z = jax.nn.sigmoid(gi[:, hidden:2 * hidden])
    n = jnp.tanh(gi[:, 2 * hidden:3 * hidden]
                 + r * b_ref[1:2, 2 * hidden:3 * hidden])

    # h_prev == 0  ->  h_new = (1 - z) * n  (the z * h_prev term is exactly 0).
    out_ref[...] = ((1.0 - z) * n).astype(out_ref.dtype)


def pack_gru_params(weight_ih, weight_hh, bias_ih, bias_hh):
    """One-time parameter repacking (call at init, reuse across calls).

    Returns:
      w_packed: (2, 3H) float32 = weight_ih.T, gates [r | z | n] along lanes.
      b_packed: (2, 3H) float32, row 0 = combined biases, row 1 = bias_hh_n.
    """
    hidden = weight_hh.shape[1]
    assert weight_ih.shape == (3 * hidden, 2)
    assert weight_hh.shape == (3 * hidden, hidden)

    w_packed = jnp.transpose(weight_ih).astype(jnp.float32)          # (2, 3H)

    b_top = jnp.concatenate(
        [bias_ih[:2 * hidden] + bias_hh[:2 * hidden],                 # r and z
         bias_ih[2 * hidden:]]).astype(jnp.float32)                   # i_n
    b_bot = jnp.concatenate(
        [jnp.zeros((2 * hidden,), jnp.float32),
         bias_hh[2 * hidden:].astype(jnp.float32)])                   # h_n
    b_packed = jnp.stack([b_top, b_bot], axis=0)                      # (2, 3H)
    return w_packed, b_packed


def model_flow_encoder_forward(x, w_packed, b_packed):
    """x: (batch, seq, 2) float32; packed params from pack_gru_params().

    Returns (batch, feature_space) float32.
    """
    batch, seq, in_dim = x.shape
    assert in_dim == 2
    hidden = w_packed.shape[1] // 3

    vmem = pl.BlockSpec(memory_space=pltpu.MemorySpace.VMEM)
    cost = pl.CostEstimate(
        flops=batch * 3 * hidden * 6,
        transcendentals=batch * 3 * hidden,
        bytes_accessed=(x.size + w_packed.size + b_packed.size
                        + batch * hidden) * 4,
    )

    return pl.pallas_call(
        _gru_last_step_kernel,
        out_shape=jax.ShapeDtypeStruct((batch, hidden), jnp.float32),
        in_specs=[vmem, vmem, vmem],
        out_specs=vmem,
        cost_estimate=cost,
    )(x, w_packed, b_packed)


def _reference_forward(x, weight_ih, weight_hh, bias_ih, bias_hh):
    """Pure-JAX replica of the (bug-faithful) PyTorch forward."""
    hidden = weight_hh.shape[1]
    h = None
    for t in range(x.shape[1]):
        xt = x[:, t, :]
        h_prev = jnp.zeros((x.shape[0], hidden), jnp.float32)
        gi = xt @ weight_ih.T + bias_ih
        gh = h_prev @ weight_hh.T + bias_hh
        i_r, i_z, i_n = jnp.split(gi, 3, axis=1)
        h_r, h_z, h_n = jnp.split(gh, 3, axis=1)
        r = jax.nn.sigmoid(i_r + h_r)
        z = jax.nn.sigmoid(i_z + h_z)
        n = jnp.tanh(i_n + r * h_n)
        h = (1.0 - z) * n + z * h_prev
    return h


if __name__ == "__main__":
    # cfg.feature_space = 32, batch = 8, cfg.sequence (seq length) = 8
    FEATURE_SPACE = 32
    BATCH = 8
    SEQ = 8
    IN_DIM = 2

    key = jax.random.PRNGKey(0)
    k_x, k_wih, k_whh, k_bih, k_bhh = jax.random.split(key, 5)

    # Deterministic parameter init, PyTorch-style U(-1/sqrt(H), 1/sqrt(H)).
    bound = 1.0 / (FEATURE_SPACE ** 0.5)
    weight_ih = jax.random.uniform(k_wih, (3 * FEATURE_SPACE, IN_DIM),
                                   jnp.float32, -bound, bound)
    weight_hh = jax.random.uniform(k_whh, (3 * FEATURE_SPACE, FEATURE_SPACE),
                                   jnp.float32, -bound, bound)
    bias_ih = jax.random.uniform(k_bih, (3 * FEATURE_SPACE,),
                                 jnp.float32, -bound, bound)
    bias_hh = jax.random.uniform(k_bhh, (3 * FEATURE_SPACE,),
                                 jnp.float32, -bound, bound)

    x = jax.random.normal(k_x, (BATCH, SEQ, IN_DIM), jnp.float32)

    # One-time packing (init-time cost, reused across every forward call).
    w_packed, b_packed = pack_gru_params(weight_ih, weight_hh, bias_ih, bias_hh)
    w_packed, b_packed = jax.block_until_ready((w_packed, b_packed))

    # TODO(synk): the PyTorch forward's optional `hidden_state` argument and its
    # torch.randn initialization are dead values (never fed to the GRUCell), so
    # they are intentionally omitted here.

    out = model_flow_encoder_forward(x, w_packed, b_packed)
    out = jax.block_until_ready(out)

    ref = _reference_forward(x, weight_ih, weight_hh, bias_ih, bias_hh)
    assert out.shape == (BATCH, FEATURE_SPACE)
    assert jnp.allclose(out, ref, atol=1e-5, rtol=1e-5)

    print("KERNEL_OK")
</pallas_src>

<mosaic_0001>
module attributes {stable_mosaic.version = 11 : i64} {
  func.func @_gru_last_step_kernel(%arg0: memref<8x8x2xf32, #tpu.memory_space<vmem>>, %arg1: memref<2x96xf32, #tpu.memory_space<vmem>>, %arg2: memref<2x96xf32, #tpu.memory_space<vmem>>, %arg3: memref<8x32xf32, #tpu.memory_space<vmem>>) attributes {dimension_semantics = [], scalar_prefetch = 0 : i64, scratch_operands = 0 : i64, tpu.core_type = #tpu.core_type<tc>} {
    %c0 = arith.constant 0 : index
    %c7 = arith.constant 7 : index
    %c0_0 = arith.constant 0 : index
    %0 = vector.load %arg0[%c0, %c7, %c0_0] : memref<8x8x2xf32, #tpu.memory_space<vmem>>, vector<8x1x2xf32>
    %1 = vector.shape_cast %0 : vector<8x1x2xf32> to vector<8x2xf32>
    %2 = vector.extract_strided_slice %1 {offsets = [0, 0], sizes = [8, 1], strides = [1, 1]} : vector<8x2xf32> to vector<8x1xf32>
    %3 = vector.extract_strided_slice %1 {offsets = [0, 1], sizes = [8, 1], strides = [1, 1]} : vector<8x2xf32> to vector<8x1xf32>
    %c0_1 = arith.constant 0 : index
    %c0_2 = arith.constant 0 : index
    %4 = vector.load %arg1[%c0_1, %c0_2] : memref<2x96xf32, #tpu.memory_space<vmem>>, vector<1x96xf32>
    %5 = vector.broadcast %2 : vector<8x1xf32> to vector<8x96xf32>
    %6 = vector.broadcast %4 : vector<1x96xf32> to vector<8x96xf32>
    %7 = arith.mulf %5, %6 : vector<8x96xf32>
    %c1 = arith.constant 1 : index
    %c0_3 = arith.constant 0 : index
    %8 = vector.load %arg1[%c1, %c0_3] : memref<2x96xf32, #tpu.memory_space<vmem>>, vector<1x96xf32>
    %9 = vector.broadcast %3 : vector<8x1xf32> to vector<8x96xf32>
    %10 = vector.broadcast %8 : vector<1x96xf32> to vector<8x96xf32>
    %11 = arith.mulf %9, %10 : vector<8x96xf32>
    %12 = arith.addf %7, %11 : vector<8x96xf32>
    %c0_4 = arith.constant 0 : index
    %c0_5 = arith.constant 0 : index
    %13 = vector.load %arg2[%c0_4, %c0_5] : memref<2x96xf32, #tpu.memory_space<vmem>>, vector<1x96xf32>
    %14 = vector.broadcast %13 : vector<1x96xf32> to vector<8x96xf32>
    %15 = arith.addf %12, %14 : vector<8x96xf32>
    %16 = vector.extract_strided_slice %15 {offsets = [0, 0], sizes = [8, 32], strides = [1, 1]} : vector<8x96xf32> to vector<8x32xf32>
    %17 = arith.negf %16 : vector<8x32xf32>
    %18 = math.exp %17 : vector<8x32xf32>
    %cst = arith.constant 1.000000e+00 : f32
    %19 = vector.broadcast %cst : f32 to vector<8x32xf32>
    %20 = arith.addf %19, %18 : vector<8x32xf32>
    %21 = arith.divf %19, %20 : vector<8x32xf32>
    %22 = vector.extract_strided_slice %15 {offsets = [0, 32], sizes = [8, 32], strides = [1, 1]} : vector<8x96xf32> to vector<8x32xf32>
    %23 = arith.negf %22 : vector<8x32xf32>
    %24 = math.exp %23 : vector<8x32xf32>
    %cst_6 = arith.constant 1.000000e+00 : f32
    %25 = vector.broadcast %cst_6 : f32 to vector<8x32xf32>
    %26 = arith.addf %25, %24 : vector<8x32xf32>
    %27 = arith.divf %25, %26 : vector<8x32xf32>
    %28 = vector.extract_strided_slice %15 {offsets = [0, 64], sizes = [8, 32], strides = [1, 1]} : vector<8x96xf32> to vector<8x32xf32>
    %c1_7 = arith.constant 1 : index
    %c64 = arith.constant 64 : index
    %29 = vector.load %arg2[%c1_7, %c64] : memref<2x96xf32, #tpu.memory_space<vmem>>, vector<1x32xf32>
    %30 = vector.broadcast %29 : vector<1x32xf32> to vector<8x32xf32>
    %31 = arith.mulf %21, %30 : vector<8x32xf32>
    %32 = arith.addf %28, %31 : vector<8x32xf32>
    %33 = math.tanh %32 : vector<8x32xf32>
    %cst_8 = arith.constant 1.000000e+00 : f32
    %34 = vector.broadcast %cst_8 : f32 to vector<8x32xf32>
    %35 = arith.subf %34, %27 : vector<8x32xf32>
    %36 = arith.mulf %35, %33 : vector<8x32xf32>
    %c0_9 = arith.constant 0 : index
    %c0_10 = arith.constant 0 : index
    %37 = vector.load %arg3[%c0_9, %c0_10] : memref<8x32xf32, #tpu.memory_space<vmem>>, vector<8x32xf32>
    tpu.vector_store %arg3[%c0_9, %c0_10], %36 {strides = array<i32>} : memref<8x32xf32, #tpu.memory_space<vmem>>, vector<8x32xf32>,
    return
  }
}

</mosaic_0001>

<llo_original>
// kernel: tpu_custom_call.1
$region0: #{tpu_custom_call.1}
  #allocation0 [shape = 'u32[]', space=smem, size = 0x4, offset = 0x4, fixed_abs, tag = 'smem constant byte address 0x4 - core index']
  #allocation1 [shape = 'u32[144,128]{1,0:T(1,128)}', space=vmem, size = 0x12000, scoped, tag = 'internal scratch']
  %s0 = inlined_call_operand.vmem [shape: f32[8,8,2], index: 0, kind: input, shape index: {}]
  %s1 = inlined_call_operand.vmem [shape: f32[2,96], index: 1, kind: input, shape index: {}]
  %s2 = inlined_call_operand.vmem [shape: f32[2,96], index: 2, kind: input, shape index: {}]
  %s3 = inlined_call_operand.hbm [shape: f32[8,32], index: 3, kind: output, shape index: {}]
  %s4 = sld [smem:[#allocation0]]
  $region22: #{tpu_custom_call.1} parent=0
    _
  %s6 = ssub.s32 1, %s4
  %s7 = scalar_select 0, %s6, %s4
  $region1: #{tpu_custom_call.1} parent=0
    #allocation2 [shape = 'u8[4096]{0}', space=vmem, size = 0x1000, scoped, tag = 'output window, operand 0, single buffered']
    #allocation3 [shape = 's32[1]{0}', space=sflag, size = 0x4, scoped, tag = 'scoped memory for tpu_custom_call.1']
    %8 = vsyncpa [#allocation3], 0
    // Predicated region
    $region2: #{tpu_custom_call.1} parent=1 // pred_check
      _
    $region3: #{tpu_custom_call.1} parent=1 // pred_check_branch
      %10 = sbr.rel (0) target = $region5
    $region4: #{tpu_custom_call.1} parent=1 // pred_region
      _
    $region5: #{tpu_custom_call.1} parent=1 // pred_fallthru
      _
    // Predicated region
    $region6: #{tpu_custom_call.1} parent=1 // pred_check
      _
    $region7: #{tpu_custom_call.1} parent=1 // pred_check_branch
      %12 = sbr.rel (0) target = $region9
    $region8: #{tpu_custom_call.1} parent=1 // pred_region
      _
    $region9: #{tpu_custom_call.1} parent=1 // pred_fallthru
      _
    // Predicated region
    $region10: #{tpu_custom_call.1} parent=1 // pred_check
      _
    $region11: #{tpu_custom_call.1} parent=1 // pred_check_branch
      %14 = sbr.rel (0) target = $region13
    $region12: #{tpu_custom_call.1} parent=1 // pred_region
      _
    $region13: #{tpu_custom_call.1} parent=1 // pred_fallthru
      _
    %v15 = vld [vmem:[%s0 + $0x7] sm:$0x1]
    %v16 = vld [vmem:[%s0 + $0xf] sm:$0x1]
    %v17 = vld [vmem:[%s0 + $0x17] sm:$0x1]
    %v18 = vld [vmem:[%s0 + $0x1f] sm:$0x1]
    %v19 = vld [vmem:[%s0 + $0x27] sm:$0x1]
    %v20 = vld [vmem:[%s0 + $0x2f] sm:$0x1]
    %v21 = vld [vmem:[%s0 + $0x37] sm:$0x1]
    %v22 = vld [vmem:[%s0 + $0x3f] sm:$0x1]
    %v23 = vld [vmem:[%s1] sm:$0x1]
    %25 = vset.pattern.permute.xlu0 0
    %26 = vperm.xlu0 %25, %v15
    %v27 = vpop.permute.xlu0 %26
    %30 = vset.pattern.permute.xlu0 0
    %31 = vperm.xlu0 %30, %v16
    %v32 = vpop.permute.xlu0 %31
    %35 = vset.pattern.permute.xlu0 0
    %36 = vperm.xlu0 %35, %v17
    %v37 = vpop.permute.xlu0 %36
    %40 = vset.pattern.permute.xlu0 0
    %41 = vperm.xlu0 %40, %v18
    %v42 = vpop.permute.xlu0 %41
    %45 = vset.pattern.permute.xlu0 0
    %46 = vperm.xlu0 %45, %v19
    %v47 = vpop.permute.xlu0 %46
    %50 = vset.pattern.permute.xlu0 0
    %51 = vperm.xlu0 %50, %v20
    %v52 = vpop.permute.xlu0 %51
    %55 = vset.pattern.permute.xlu0 0
    %56 = vperm.xlu0 %55, %v21
    %v57 = vpop.permute.xlu0 %56
    %60 = vset.pattern.permute.xlu0 0
    %61 = vperm.xlu0 %60, %v22
    %v62 = vpop.permute.xlu0 %61
    %v64 = vlaneseq
    %v65 = vshrl.u32 %v64, 7
    %v66 = vsub.s32 0, %v65
    %v67 = vrot.slane %v23, %v66
    %v68 = vmul.f32 %v27, %v67
    %v69 = vmul.f32 %v32, %v67
    %v70 = vmul.f32 %v37, %v67
    %v71 = vmul.f32 %v42, %v67
    %v72 = vmul.f32 %v47, %v67
    %v73 = vmul.f32 %v52, %v67
    %v74 = vmul.f32 %v57, %v67
    %v75 = vmul.f32 %v62, %v67
    %v76 = vld [vmem:[%s1 + $0x1] sm:$0x1]
    %77 = vset.pattern.permute.xlu0 1
    %78 = vperm.xlu0 %77, %v15
    %v79 = vpop.permute.xlu0 %78
    %81 = vset.pattern.permute.xlu0 1
    %82 = vperm.xlu0 %81, %v16
    %v83 = vpop.permute.xlu0 %82
    %85 = vset.pattern.permute.xlu0 1
    %86 = vperm.xlu0 %85, %v17
    %v87 = vpop.permute.xlu0 %86
    %89 = vset.pattern.permute.xlu0 1
    %90 = vperm.xlu0 %89, %v18
    %v91 = vpop.permute.xlu0 %90
    %93 = vset.pattern.permute.xlu0 1
    %94 = vperm.xlu0 %93, %v19
    %v95 = vpop.permute.xlu0 %94
    %97 = vset.pattern.permute.xlu0 1
    %98 = vperm.xlu0 %97, %v20
    %v99 = vpop.permute.xlu0 %98
    %101 = vset.pattern.permute.xlu0 1
    %102 = vperm.xlu0 %101, %v21
    %v103 = vpop.permute.xlu0 %102
    %105 = vset.pattern.permute.xlu0 1
    %106 = vperm.xlu0 %105, %v22
    %v107 = vpop.permute.xlu0 %106
    %v109 = vlaneseq
    %v110 = vshrl.u32 %v109, 7
    %v111 = vsub.s32 0, %v110
    %v112 = vrot.slane %v76, %v111
    %v113 = vmul.f32 %v79, %v112
    %v114 = vmul.f32 %v83, %v112
    %v115 = vmul.f32 %v87, %v112
    %v116 = vmul.f32 %v91, %v112
    %v117 = vmul.f32 %v95, %v112
    %v118 = vmul.f32 %v99, %v112
    %v119 = vmul.f32 %v103, %v112
    %v120 = vmul.f32 %v107, %v112
    %v121 = vadd.f32 %v68, %v113
    %v122 = vadd.f32 %v69, %v114
    %v123 = vadd.f32 %v70, %v115
    %v124 = vadd.f32 %v71, %v116
    %v125 = vadd.f32 %v72, %v117
    %v126 = vadd.f32 %v73, %v118
    %v127 = vadd.f32 %v74, %v119
    %v128 = vadd.f32 %v75, %v120
    %v129 = vld [vmem:[%s2] sm:$0x1]
    %v130 = vlaneseq
    %v131 = vshrl.u32 %v130, 7
    %v132 = vsub.s32 0, %v131
    %v133 = vrot.slane %v129, %v132
    %v134 = vadd.f32 %v121, %v133
    %v135 = vadd.f32 %v122, %v133
    %v136 = vadd.f32 %v123, %v133
    %v137 = vadd.f32 %v124, %v133
    %v138 = vadd.f32 %v125, %v133
    %v139 = vadd.f32 %v126, %v133
    %v140 = vadd.f32 %v127, %v133
    %v141 = vadd.f32 %v128, %v133
    %v142 = vxor.u32 %v134, 2147483648
    %v143 = vxor.u32 %v135, 2147483648
    %v144 = vxor.u32 %v136, 2147483648
    %v145 = vxor.u32 %v137, 2147483648
    %v146 = vxor.u32 %v138, 2147483648
    %v147 = vxor.u32 %v139, 2147483648
    %v148 = vxor.u32 %v140, 2147483648
    %v149 = vxor.u32 %v141, 2147483648
    %v150 = vmul.f32 %v142, 1.442695
    %v151 = vpow.pop %v150
    %v152 = vmul.f32 %v143, 1.442695
    %v153 = vpow.pop %v152
    %v154 = vmul.f32 %v144, 1.442695
    %v155 = vpow.pop %v154
    %v156 = vmul.f32 %v145, 1.442695
    %v157 = vpow.pop %v156
    %v158 = vmul.f32 %v146, 1.442695
    %v159 = vpow.pop %v158
    %v160 = vmul.f32 %v147, 1.442695
    %v161 = vpow.pop %v160
    %v162 = vmul.f32 %v148, 1.442695
    %v163 = vpow.pop %v162
    %v164 = vmul.f32 %v149, 1.442695
    %v165 = vpow.pop %v164
    %v166 = vadd.f32 %v151, 1.0
    %v167 = vadd.f32 %v153, 1.0
    %v168 = vadd.f32 %v155, 1.0
    %v169 = vadd.f32 %v157, 1.0
    %v170 = vadd.f32 %v159, 1.0
    %v171 = vadd.f32 %v161, 1.0
    %v172 = vadd.f32 %v163, 1.0
    %v173 = vadd.f32 %v165, 1.0
    %v174 = vrcp.pop %v166
    %v175 = vmul.f32 1.0, %v174
    %v176 = vrcp.pop %v167
    %v177 = vmul.f32 1.0, %v176
    %v178 = vrcp.pop %v168
    %v179 = vmul.f32 1.0, %v178
    %v180 = vrcp.pop %v169
    %v181 = vmul.f32 1.0, %v180
    %v182 = vrcp.pop %v170
    %v183 = vmul.f32 1.0, %v182
    %v184 = vrcp.pop %v171
    %v185 = vmul.f32 1.0, %v184
    %v186 = vrcp.pop %v172
    %v187 = vmul.f32 1.0, %v186
    %v188 = vrcp.pop %v173
    %v189 = vmul.f32 1.0, %v188
    %v190 = vld [vmem:[%s2 + $0x1] sm:$0x1]
    %v191 = vlaneseq
    %v192 = vshrl.u32 %v191, 7
    %v193 = vsub.s32 0, %v192
    %v194 = vrot.slane %v190, %v193
    %196 = vrot.lane.b32.xlu0 %v194, 64
    %v197 = vpop.permute.xlu0 %196
    %v199 = vmul.f32 %v175, %v197
    %v200 = vmul.f32 %v177, %v197
    %v201 = vmul.f32 %v179, %v197
    %v202 = vmul.f32 %v181, %v197
    %v203 = vmul.f32 %v183, %v197
    %v204 = vmul.f32 %v185, %v197
    %v205 = vmul.f32 %v187, %v197
    %v206 = vmul.f32 %v189, %v197
    %215 = vrot.lane.b32.xlu0 %v199, 64
    %v216 = vpop.permute.xlu0 %215
    %217 = vrot.lane.b32.xlu0 %v200, 64
    %v218 = vpop.permute.xlu0 %217
    %219 = vrot.lane.b32.xlu0 %v201, 64
    %v220 = vpop.permute.xlu0 %219
    %221 = vrot.lane.b32.xlu0 %v202, 64
    %v222 = vpop.permute.xlu0 %221
    %223 = vrot.lane.b32.xlu0 %v203, 64
    %v224 = vpop.permute.xlu0 %223
    %225 = vrot.lane.b32.xlu0 %v204, 64
    %v226 = vpop.permute.xlu0 %225
    %227 = vrot.lane.b32.xlu0 %v205, 64
    %v228 = vpop.permute.xlu0 %227
    %229 = vrot.lane.b32.xlu0 %v206, 64
    %v230 = vpop.permute.xlu0 %229
    %v239 = vadd.f32 %v134, %v216
    %v240 = vadd.f32 %v135, %v218
    %v241 = vadd.f32 %v136, %v220
    %v242 = vadd.f32 %v137, %v222
    %v243 = vadd.f32 %v138, %v224
    %v244 = vadd.f32 %v139, %v226
    %v245 = vadd.f32 %v140, %v228
    %v246 = vadd.f32 %v141, %v230
    %v247 = vtanh.pop %v239
    %v248 = vtanh.pop %v240
    %v249 = vtanh.pop %v241
    %v250 = vtanh.pop %v242
    %v251 = vtanh.pop %v243
    %v252 = vtanh.pop %v244
    %v253 = vtanh.pop %v245
    %v254 = vtanh.pop %v246
    %v255 = vsub.f32 1.0, %v175
    %v256 = vsub.f32 1.0, %v177
    %v257 = vsub.f32 1.0, %v179
    %v258 = vsub.f32 1.0, %v181
    %v259 = vsub.f32 1.0, %v183
    %v260 = vsub.f32 1.0, %v185
    %v261 = vsub.f32 1.0, %v187
    %v262 = vsub.f32 1.0, %v189
    %271 = vrot.lane.b32.xlu0 %v247, 96
    %v272 = vpop.permute.xlu0 %271
    %273 = vrot.lane.b32.xlu0 %v248, 96
    %v274 = vpop.permute.xlu0 %273
    %275 = vrot.lane.b32.xlu0 %v249, 96
    %v276 = vpop.permute.xlu0 %275
    %277 = vrot.lane.b32.xlu0 %v250, 96
    %v278 = vpop.permute.xlu0 %277
    %279 = vrot.lane.b32.xlu0 %v251, 96
    %v280 = vpop.permute.xlu0 %279
    %281 = vrot.lane.b32.xlu0 %v252, 96
    %v282 = vpop.permute.xlu0 %281
    %283 = vrot.lane.b32.xlu0 %v253, 96
    %v284 = vpop.permute.xlu0 %283
    %285 = vrot.lane.b32.xlu0 %v254, 96
    %v286 = vpop.permute.xlu0 %285
    %v295 = vmul.f32 %v255, %v272
    %v296 = vmul.f32 %v256, %v274
    %v297 = vmul.f32 %v257, %v276
    %v298 = vmul.f32 %v258, %v278
    %v299 = vmul.f32 %v259, %v280
    %v300 = vmul.f32 %v260, %v282
    %v301 = vmul.f32 %v261, %v284
    %v302 = vmul.f32 %v262, %v286
    %v311 = vrot.slane %v296, 7
    %vm312 = vcmask 1041409
    %v313 = vsel %vm312, %v311, %v295
    %v314 = vrot.slane %v297, 6
    %vm315 = vcmask 1042434
    %v316 = vsel %vm315, %v314, %v313
    %v317 = vrot.slane %v298, 5
    %vm318 = vcmask 1043459
    %v319 = vsel %vm318, %v317, %v316
    %v320 = vrot.slane %v299, 4
    %vm321 = vcmask 1044484
    %v322 = vsel %vm321, %v320, %v319
    %v323 = vrot.slane %v300, 3
    %vm324 = vcmask 1045509
    %v325 = vsel %vm324, %v323, %v322
    %v326 = vrot.slane %v301, 2
    %vm327 = vcmask 1046534
    %v328 = vsel %vm327, %v326, %v325
    %v329 = vrot.slane %v302, 1
    %vm330 = vcmask 1047559
    %v331 = vsel %vm330, %v329, %v328
    %332 = vrot.lane.b32.xlu0 %v331, 96
    %v333 = vpop.permute.xlu0 %332
    %vm335 = vcmask 261120
    %336 = vst.msk [vmem:[#allocation2] sm:$0xff] %vm335, %v333
    // Predicated region
    $region14: #{tpu_custom_call.1} parent=1 // pred_check
      _
    $region15: #{tpu_custom_call.1} parent=1 // pred_check_branch
      %338 = sbr.rel (0) target = $region17
    $region16: #{tpu_custom_call.1} parent=1 // pred_region
      %s340 = ssub.s32 128, 128
      %341 = vsyncadd [#allocation3], %s340
      %s343 = sshll.u32 [#allocation2], 4
      %s344 = int_to_ptr.vmem [resolvable:$true] %s343
      %346 = dma.vmem_to_hbm [thread:$0]  %s344, 128, %s3, [#allocation3]
    $region17: #{tpu_custom_call.1} parent=1 // pred_fallthru
      _
    // Predicated region
    $region18: #{tpu_custom_call.1} parent=1 // pred_check
      _
    $region19: #{tpu_custom_call.1} parent=1 // pred_check_branch
      %348 = sbr.rel (0) target = $region21
    $region20: #{tpu_custom_call.1} parent=1 // pred_region
      %349 = dma.done [#allocation3], 128
    $region21: #{tpu_custom_call.1} parent=1 // pred_fallthru
      _
    %350 = vsyncpa [#allocation3], 1

</llo_original>
